<compile_context>
chip_gen: v6e
topology: v6e:2x2x1
jax: 0.10.0
libtpu: 0.0.40
codegen_flags: <defaults>
</compile_context>

<pallas_src>
import jax
import jax.numpy as jnp
from jax.experimental import pallas as pl
from jax.experimental.pallas import tpu as pltpu

LEAKY_SLOPE = 0.01   # nn.LeakyReLU default negative_slope
BN_EPS = 1e-5        # nn.BatchNorm1d default eps


def _round_up(n, m):
    return ((n + m - 1) // m) * m


# ----------------------------------------------------------------------------- kernel

def wangnet_kernel(cont_ref, emb_ref,
                   w1c_ref, w1e_ref, b1_ref,
                   w2_ref, b2_ref,
                   wo_ref, bo_ref,
                   out_ref):
    # layer 1: Linear over [cont ++ emb] done as two dots (concat eliminated) + bias
    h = (jnp.dot(cont_ref[...], w1c_ref[...], preferred_element_type=jnp.float32)
         + jnp.dot(emb_ref[...], w1e_ref[...], preferred_element_type=jnp.float32)
         + b1_ref[...])
    h = jnp.where(h >= 0, h, LEAKY_SLOPE * h)                       # LeakyReLU
    # layer 2: BN1 already folded into (w2, b2)
    h = (jnp.dot(h.astype(w2_ref.dtype), w2_ref[...],
                 preferred_element_type=jnp.float32) + b2_ref[...])
    h = jnp.where(h >= 0, h, LEAKY_SLOPE * h)
    # output layer: BN2 already folded into (wo, bo)
    out_ref[...] = (jnp.dot(h.astype(wo_ref.dtype), wo_ref[...],
                            preferred_element_type=jnp.float32)
                    + bo_ref[...]).astype(out_ref.dtype)


# ----------------------------------------------------------------------------- wrapper

def _fold_params(params, n_cont, weights_dtype):
    """Fold eval-mode BatchNorm into the following Linear; split W1 into cont/emb parts."""
    def bn_scale_shift(g, be, rm, rv):
        scale = g * jax.lax.rsqrt(rv + BN_EPS)       # (1, n)
        shift = be - rm * scale                      # (1, n)
        return scale, shift

    s1, t1 = bn_scale_shift(params["g1"], params["be1"], params["rm1"], params["rv1"])
    s2, t2 = bn_scale_shift(params["g2"], params["be2"], params["rm2"], params["rv2"])

    w1 = params["w1"]                                # (n_cont + emb_dim, n1), pre-transposed
    w1c, w1e = w1[:n_cont], w1[n_cont:]
    b1 = params["b1"]

    # y1 = relu1*s1 + t1  =>  y1 @ W2 + b2 = relu1 @ (s1.T * W2) + (t1 @ W2 + b2)
    w2 = params["w2"] * s1.T
    b2 = params["b2"] + t1 @ params["w2"]
    wo = params["wo"] * s2.T
    bo = params["bo"] + t2 @ params["wo"]

    cast = lambda w: w.astype(weights_dtype)
    f32 = lambda b: b.astype(jnp.float32)
    return dict(w1c=cast(w1c), w1e=cast(w1e), b1=f32(b1),
                w2=cast(w2), b2=f32(b2), wo=cast(wo), bo=f32(bo))


def wangnet_forward(cont_data, cat_data, params, *,
                    block_rows=512, weights_dtype=jnp.float32):
    """Eval-mode forward matching `model.eval(); model(cont, cat)`."""
    B, n_cont = cont_data.shape
    kp = _fold_params(params, n_cont, weights_dtype)

    # embedding gather is cheap glue; concat is gone (layer-1 weight is split instead)
    x_emb = jnp.take(params["emb_table"], cat_data.astype(jnp.int32), axis=0)

    cont = cont_data.astype(weights_dtype)
    x_emb = x_emb.astype(weights_dtype)

    # batch tiling: TB multiple of 8 (f32 sublane), capped at block_rows
    tb = min(block_rows, _round_up(B, 8))
    b_pad = _round_up(B, tb)
    if b_pad != B:
        cont = jnp.pad(cont, ((0, b_pad - B), (0, 0)))
        x_emb = jnp.pad(x_emb, ((0, b_pad - B), (0, 0)))

    emb_dim = x_emb.shape[1]
    n_out = kp["wo"].shape[1]

    def row_spec(feat):               # streamed, one (tb, feat) block per grid step
        return pl.BlockSpec((tb, feat), lambda i: (i, 0))

    def resident_spec(arr):           # constant index_map -> DMA'd once, stays in VMEM
        return pl.BlockSpec(arr.shape, lambda i: (0, 0))

    operands = (cont, x_emb,
                kp["w1c"], kp["w1e"], kp["b1"],
                kp["w2"], kp["b2"],
                kp["wo"], kp["bo"])
    in_specs = ([row_spec(n_cont), row_spec(emb_dim)]
                + [resident_spec(a) for a in operands[2:]])

    out = pl.pallas_call(
        wangnet_kernel,
        out_shape=jax.ShapeDtypeStruct((b_pad, n_out), jnp.float32),
        grid=(b_pad // tb,),
        in_specs=in_specs,
        out_specs=row_spec(n_out),
        compiler_params=pltpu.CompilerParams(
            dimension_semantics=("parallel",)),   # megacore / v7x 2-TC split over batch
    )(*operands)
    return out[:B]


# ----------------------------------------------------------------------------- params / reference

def init_params(key, num_emb, emb_dim, no_of_cont, lin_sizes, out_size):
    """Parameters with the same shapes/semantics as WangNet.__init__ (eval mode).

    BatchNorm running stats are randomized (as after training) so the BN-folding path
    is exercised non-trivially by the correctness check."""
    ks = jax.random.split(key, 16)
    in_size = emb_dim + no_of_cont

    def kaiming(k, fan_in, shape):
        return jax.random.normal(k, shape, jnp.float32) * jnp.sqrt(2.0 / fan_in)

    def unif_bias(k, fan_in, n):
        bound = 1.0 / jnp.sqrt(fan_in)
        return jax.random.uniform(k, (1, n), jnp.float32, -bound, bound)

    def bn_params(k, n):
        kg, kb, km, kv = jax.random.split(k, 4)
        return dict(g=jax.random.uniform(kg, (1, n), jnp.float32, 0.5, 1.5),
                    be=0.1 * jax.random.normal(kb, (1, n), jnp.float32),
                    rm=0.1 * jax.random.normal(km, (1, n), jnp.float32),
                    rv=jax.random.uniform(kv, (1, n), jnp.float32, 0.5, 1.5))

    params = {}
    params["emb_table"] = jax.random.normal(ks[0], (num_emb, emb_dim), jnp.float32)

    params["w1"] = kaiming(ks[1], in_size, (lin_sizes[0], in_size)).T   # (in, n1)
    params["b1"] = unif_bias(ks[2], in_size, lin_sizes[0])
    bn1 = bn_params(ks[3], lin_sizes[0])
    params.update(g1=bn1["g"], be1=bn1["be"], rm1=bn1["rm"], rv1=bn1["rv"])

    params["w2"] = kaiming(ks[4], lin_sizes[0], (lin_sizes[1], lin_sizes[0])).T
    params["b2"] = unif_bias(ks[5], lin_sizes[0], lin_sizes[1])
    bn2 = bn_params(ks[6], lin_sizes[1])
    params.update(g2=bn2["g"], be2=bn2["be"], rm2=bn2["rm"], rv2=bn2["rv"])

    params["wo"] = kaiming(ks[7], lin_sizes[1], (out_size, lin_sizes[1])).T
    params["bo"] = unif_bias(ks[8], lin_sizes[1], out_size)
    return params


def reference_forward(cont_data, cat_data, params):
    """Pure-JAX reference with the original (non-folded) eval-mode math."""
    x_emb = jnp.take(params["emb_table"], cat_data.astype(jnp.int32), axis=0)
    x = jnp.concatenate([cont_data, x_emb], axis=1)
    for i in ("1", "2"):
        h = x @ params["w" + i] + params["b" + i]
        h = jnp.where(h >= 0, h, LEAKY_SLOPE * h)
        x = ((h - params["rm" + i]) * jax.lax.rsqrt(params["rv" + i] + BN_EPS)
             * params["g" + i] + params["be" + i])
    return x @ params["wo"] + params["bo"]


# ----------------------------------------------------------------------------- demo

if __name__ == "__main__":
    # emb_dims=(10, 16), no_of_cont=16, lin_layer_sizes=[64, 32], output_size=8, batch=8
    B = 8
    NUM_EMB, EMB_DIM = 10, 16
    NO_OF_CONT = 16
    LIN_SIZES = [64, 32]
    OUT_SIZE = 8

    key = jax.random.PRNGKey(0)
    k_param, k_cont, k_cat = jax.random.split(key, 3)

    params = init_params(k_param, NUM_EMB, EMB_DIM, NO_OF_CONT, LIN_SIZES, OUT_SIZE)
    cont_data = jax.random.normal(k_cont, (B, NO_OF_CONT), jnp.float32)
    cat_data = jax.random.randint(k_cat, (B,), 0, NUM_EMB, jnp.int32)

    fwd = jax.jit(lambda c, k, p: wangnet_forward(c, k, p))
    out = jax.block_until_ready(fwd(cont_data, cat_data, params))

    ref = reference_forward(cont_data, cat_data, params)
    assert out.shape == (B, OUT_SIZE)
    assert jnp.allclose(out, ref, atol=1e-3, rtol=1e-3)

    print("KERNEL_OK")
</pallas_src>

<mosaic_0001>
module attributes {stable_mosaic.version = 11 : i64} {
  func.func @wangnet_kernel(%arg0: i32, %arg1: memref<8x16xf32, #tpu.memory_space<vmem>>, %arg2: memref<8x16xf32, #tpu.memory_space<vmem>>, %arg3: memref<16x64xf32, #tpu.memory_space<vmem>>, %arg4: memref<16x64xf32, #tpu.memory_space<vmem>>, %arg5: memref<1x64xf32, #tpu.memory_space<vmem>>, %arg6: memref<64x32xf32, #tpu.memory_space<vmem>>, %arg7: memref<1x32xf32, #tpu.memory_space<vmem>>, %arg8: memref<32x8xf32, #tpu.memory_space<vmem>>, %arg9: memref<1x8xf32, #tpu.memory_space<vmem>>, %arg10: memref<8x8xf32, #tpu.memory_space<vmem>>) attributes {dimension_semantics = [#tpu.dimension_semantics<parallel>], iteration_bounds = array<i64: 1>, scalar_prefetch = 0 : i64, scratch_operands = 0 : i64, tpu.core_type = #tpu.core_type<tc>, window_params = [{transform_indices = @transform_0, window_bounds = array<i64: 8, 16>}, {transform_indices = @transform_1, window_bounds = array<i64: 8, 16>}, {pipeline_mode = #tpu.pipeline_mode<synchronous>, transform_indices = @transform_2, window_bounds = array<i64: 16, 64>}, {pipeline_mode = #tpu.pipeline_mode<synchronous>, transform_indices = @transform_3, window_bounds = array<i64: 16, 64>}, {pipeline_mode = #tpu.pipeline_mode<synchronous>, transform_indices = @transform_4, window_bounds = array<i64: 1, 64>}, {pipeline_mode = #tpu.pipeline_mode<synchronous>, transform_indices = @transform_5, window_bounds = array<i64: 64, 32>}, {pipeline_mode = #tpu.pipeline_mode<synchronous>, transform_indices = @transform_6, window_bounds = array<i64: 1, 32>}, {pipeline_mode = #tpu.pipeline_mode<synchronous>, transform_indices = @transform_7, window_bounds = array<i64: 32, 8>}, {pipeline_mode = #tpu.pipeline_mode<synchronous>, transform_indices = @transform_8, window_bounds = array<i64: 1, 8>}, {transform_indices = @transform_9, window_bounds = array<i64: 8, 8>}]} {
    %c0 = arith.constant 0 : index
    %c0_0 = arith.constant 0 : index
    %0 = vector.load %arg1[%c0, %c0_0] : memref<8x16xf32, #tpu.memory_space<vmem>>, vector<8x16xf32>
    %c0_1 = arith.constant 0 : index
    %c0_2 = arith.constant 0 : index
    %1 = vector.load %arg3[%c0_1, %c0_2] : memref<16x64xf32, #tpu.memory_space<vmem>>, vector<16x64xf32>
    %cst = arith.constant dense<0.000000e+00> : vector<8x64xf32>
    %2 = tpu.matmul %0, %1, %cst {dimension_numbers = #tpu.dot_dimension_numbers<[1], [0], [0], [1], [0, 0, 1, 1], [], []>} : vector<8x16xf32>, vector<16x64xf32>, vector<8x64xf32> -> vector<8x64xf32>
    %c0_3 = arith.constant 0 : index
    %c0_4 = arith.constant 0 : index
    %3 = vector.load %arg2[%c0_3, %c0_4] : memref<8x16xf32, #tpu.memory_space<vmem>>, vector<8x16xf32>
    %c0_5 = arith.constant 0 : index
    %c0_6 = arith.constant 0 : index
    %4 = vector.load %arg4[%c0_5, %c0_6] : memref<16x64xf32, #tpu.memory_space<vmem>>, vector<16x64xf32>
    %cst_7 = arith.constant dense<0.000000e+00> : vector<8x64xf32>
    %5 = tpu.matmul %3, %4, %cst_7 {dimension_numbers = #tpu.dot_dimension_numbers<[1], [0], [0], [1], [0, 0, 1, 1], [], []>} : vector<8x16xf32>, vector<16x64xf32>, vector<8x64xf32> -> vector<8x64xf32>
    %6 = arith.addf %2, %5 : vector<8x64xf32>
    %c0_8 = arith.constant 0 : index
    %c0_9 = arith.constant 0 : index
    %7 = vector.load %arg5[%c0_8, %c0_9] : memref<1x64xf32, #tpu.memory_space<vmem>>, vector<1x64xf32>
    %8 = vector.broadcast %7 : vector<1x64xf32> to vector<8x64xf32>
    %9 = arith.addf %6, %8 : vector<8x64xf32>
    %cst_10 = arith.constant 0.000000e+00 : f32
    %10 = vector.broadcast %cst_10 : f32 to vector<8x64xf32>
    %11 = arith.cmpf oge, %9, %10 : vector<8x64xf32>
    %cst_11 = arith.constant 0.00999999977 : f32
    %12 = vector.broadcast %cst_11 : f32 to vector<8x64xf32>
    %13 = arith.mulf %12, %9 : vector<8x64xf32>
    %14 = arith.select %11, %9, %13 : vector<8x64xi1>, vector<8x64xf32>
    %c0_12 = arith.constant 0 : index
    %c0_13 = arith.constant 0 : index
    %15 = vector.load %arg6[%c0_12, %c0_13] : memref<64x32xf32, #tpu.memory_space<vmem>>, vector<64x32xf32>
    %cst_14 = arith.constant dense<0.000000e+00> : vector<8x32xf32>
    %16 = tpu.matmul %14, %15, %cst_14 {dimension_numbers = #tpu.dot_dimension_numbers<[1], [0], [0], [1], [0, 0, 1, 1], [], []>} : vector<8x64xf32>, vector<64x32xf32>, vector<8x32xf32> -> vector<8x32xf32>
    %c0_15 = arith.constant 0 : index
    %c0_16 = arith.constant 0 : index
    %17 = vector.load %arg7[%c0_15, %c0_16] : memref<1x32xf32, #tpu.memory_space<vmem>>, vector<1x32xf32>
    %18 = vector.broadcast %17 : vector<1x32xf32> to vector<8x32xf32>
    %19 = arith.addf %16, %18 : vector<8x32xf32>
    %cst_17 = arith.constant 0.000000e+00 : f32
    %20 = vector.broadcast %cst_17 : f32 to vector<8x32xf32>
    %21 = arith.cmpf oge, %19, %20 : vector<8x32xf32>
    %cst_18 = arith.constant 0.00999999977 : f32
    %22 = vector.broadcast %cst_18 : f32 to vector<8x32xf32>
    %23 = arith.mulf %22, %19 : vector<8x32xf32>
    %24 = arith.select %21, %19, %23 : vector<8x32xi1>, vector<8x32xf32>
    %c0_19 = arith.constant 0 : index
    %c0_20 = arith.constant 0 : index
    %25 = vector.load %arg8[%c0_19, %c0_20] : memref<32x8xf32, #tpu.memory_space<vmem>>, vector<32x8xf32>
    %cst_21 = arith.constant dense<0.000000e+00> : vector<8x8xf32>
    %26 = tpu.matmul %24, %25, %cst_21 {dimension_numbers = #tpu.dot_dimension_numbers<[1], [0], [0], [1], [0, 0, 1, 1], [], []>} : vector<8x32xf32>, vector<32x8xf32>, vector<8x8xf32> -> vector<8x8xf32>
    %c0_22 = arith.constant 0 : index
    %c0_23 = arith.constant 0 : index
    %27 = vector.load %arg9[%c0_22, %c0_23] : memref<1x8xf32, #tpu.memory_space<vmem>>, vector<1x8xf32>
    %28 = vector.broadcast %27 : vector<1x8xf32> to vector<8x8xf32>
    %29 = arith.addf %26, %28 : vector<8x8xf32>
    %c0_24 = arith.constant 0 : index
    %c0_25 = arith.constant 0 : index
    %30 = vector.load %arg10[%c0_24, %c0_25] : memref<8x8xf32, #tpu.memory_space<vmem>>, vector<8x8xf32>
    tpu.vector_store %arg10[%c0_24, %c0_25], %29 {strides = array<i32>} : memref<8x8xf32, #tpu.memory_space<vmem>>, vector<8x8xf32>,
    return
  }
  func.func @transform_0(%arg0: i32) -> (i32, i32) {
    %c0_i32 = arith.constant 0 : i32
    %c0_i32_0 = arith.constant 0 : i32
    return %arg0, %c0_i32 : i32, i32
  }
  func.func @transform_1(%arg0: i32) -> (i32, i32) {
    %c0_i32 = arith.constant 0 : i32
    %c0_i32_0 = arith.constant 0 : i32
    return %arg0, %c0_i32 : i32, i32
  }
  func.func @transform_2(%arg0: i32) -> (i32, i32) {
    %c0_i32 = arith.constant 0 : i32
    %c0_i32_0 = arith.constant 0 : i32
    %c0_i32_1 = arith.constant 0 : i32
    return %c0_i32, %c0_i32_0 : i32, i32
  }
  func.func @transform_3(%arg0: i32) -> (i32, i32) {
    %c0_i32 = arith.constant 0 : i32
    %c0_i32_0 = arith.constant 0 : i32
    %c0_i32_1 = arith.constant 0 : i32
    return %c0_i32, %c0_i32_0 : i32, i32
  }
  func.func @transform_4(%arg0: i32) -> (i32, i32) {
    %c0_i32 = arith.constant 0 : i32
    %c0_i32_0 = arith.constant 0 : i32
    %c0_i32_1 = arith.constant 0 : i32
    return %c0_i32, %c0_i32_0 : i32, i32
  }
  func.func @transform_5(%arg0: i32) -> (i32, i32) {
    %c0_i32 = arith.constant 0 : i32
    %c0_i32_0 = arith.constant 0 : i32
    %c0_i32_1 = arith.constant 0 : i32
    return %c0_i32, %c0_i32_0 : i32, i32
  }
  func.func @transform_6(%arg0: i32) -> (i32, i32) {
    %c0_i32 = arith.constant 0 : i32
    %c0_i32_0 = arith.constant 0 : i32
    %c0_i32_1 = arith.constant 0 : i32
    return %c0_i32, %c0_i32_0 : i32, i32
  }
  func.func @transform_7(%arg0: i32) -> (i32, i32) {
    %c0_i32 = arith.constant 0 : i32
    %c0_i32_0 = arith.constant 0 : i32
    %c0_i32_1 = arith.constant 0 : i32
    return %c0_i32, %c0_i32_0 : i32, i32
  }
  func.func @transform_8(%arg0: i32) -> (i32, i32) {
    %c0_i32 = arith.constant 0 : i32
    %c0_i32_0 = arith.constant 0 : i32
    %c0_i32_1 = arith.constant 0 : i32
    return %c0_i32, %c0_i32_0 : i32, i32
  }
  func.func @transform_9(%arg0: i32) -> (i32, i32) {
    %c0_i32 = arith.constant 0 : i32
    %c0_i32_0 = arith.constant 0 : i32
    return %arg0, %c0_i32 : i32, i32
  }
}

</mosaic_0001>

<llo_original>
// kernel: _lambda_.1
$region0: #{_lambda_.1}
  #allocation0 [shape = 'u32[]', space=smem, size = 0x4, offset = 0x4, fixed_abs, tag = 'smem constant byte address 0x4 - core index']
  #allocation1 [shape = 'u32[144,128]{1,0:T(1,128)}', space=vmem, size = 0x12000, scoped, tag = 'internal scratch']
  %s0 = inlined_call_operand.vmem [shape: f32[8,16], index: 0, kind: input, shape index: {}]
  %s1 = inlined_call_operand.vmem [shape: f32[8,16], index: 1, kind: input, shape index: {}]
  %s2 = inlined_call_operand.vmem [shape: f32[16,64], index: 2, kind: input, shape index: {}]
  %s3 = inlined_call_operand.vmem [shape: f32[16,64], index: 3, kind: input, shape index: {}]
  %s4 = inlined_call_operand.vmem [shape: f32[1,64], index: 4, kind: input, shape index: {}]
  %s5 = inlined_call_operand.vmem [shape: f32[64,32], index: 5, kind: input, shape index: {}]
  %s6 = inlined_call_operand.vmem [shape: f32[1,32], index: 6, kind: input, shape index: {}]
  %s7 = inlined_call_operand.vmem [shape: f32[32,8], index: 7, kind: input, shape index: {}]
  %s8 = inlined_call_operand.vmem [shape: f32[1,8], index: 8, kind: input, shape index: {}]
  %s9 = inlined_call_operand.hbm [shape: f32[8,8], index: 9, kind: output, shape index: {}]
  %s10 = sld [smem:[#allocation0]]
  $region46: #{_lambda_.1} parent=0
    _
  %s12 = ssub.s32 1, %s10
  %s13 = scalar_select 0, %s12, %s10
  $region1: #{_lambda_.1} parent=0
    #allocation2 [shape = 'u8[4096]{0}', space=vmem, size = 0x1000, scoped, tag = 'output window, operand 0, single buffered']
    #allocation3 [shape = 's32[1]{0}', space=sflag, size = 0x4, scoped, tag = 'scoped memory for _lambda_.1']
    %14 = vsyncpa [#allocation3], 0
    // Predicated region
    $region2: #{_lambda_.1} parent=1 // pred_check
      _
    $region3: #{_lambda_.1} parent=1 // pred_check_branch
      %16 = sbr.rel (0) target = $region5
    $region4: #{_lambda_.1} parent=1 // pred_region
      _
    $region5: #{_lambda_.1} parent=1 // pred_fallthru
      _
    // Predicated region
    $region6: #{_lambda_.1} parent=1 // pred_check
      _
    $region7: #{_lambda_.1} parent=1 // pred_check_branch
      %18 = sbr.rel (0) target = $region9
    $region8: #{_lambda_.1} parent=1 // pred_region
      _
    $region9: #{_lambda_.1} parent=1 // pred_fallthru
      _
    // Predicated region
    $region10: #{_lambda_.1} parent=1 // pred_check
      _
    $region11: #{_lambda_.1} parent=1 // pred_check_branch
      %20 = sbr.rel (0) target = $region13
    $region12: #{_lambda_.1} parent=1 // pred_region
      _
    $region13: #{_lambda_.1} parent=1 // pred_fallthru
      _
    // Predicated region
    $region14: #{_lambda_.1} parent=1 // pred_check
      _
    $region15: #{_lambda_.1} parent=1 // pred_check_branch
      %22 = sbr.rel (0) target = $region17
    $region16: #{_lambda_.1} parent=1 // pred_region
      _
    $region17: #{_lambda_.1} parent=1 // pred_fallthru
      _
    // Predicated region
    $region18: #{_lambda_.1} parent=1 // pred_check
      _
    $region19: #{_lambda_.1} parent=1 // pred_check_branch
      %24 = sbr.rel (0) target = $region21
    $region20: #{_lambda_.1} parent=1 // pred_region
      _
    $region21: #{_lambda_.1} parent=1 // pred_fallthru
      _
    // Predicated region
    $region22: #{_lambda_.1} parent=1 // pred_check
      _
    $region23: #{_lambda_.1} parent=1 // pred_check_branch
      %26 = sbr.rel (0) target = $region25
    $region24: #{_lambda_.1} parent=1 // pred_region
      _
    $region25: #{_lambda_.1} parent=1 // pred_fallthru
      _
    // Predicated region
    $region26: #{_lambda_.1} parent=1 // pred_check
      _
    $region27: #{_lambda_.1} parent=1 // pred_check_branch
      %28 = sbr.rel (0) target = $region29
    $region28: #{_lambda_.1} parent=1 // pred_region
      _
    $region29: #{_lambda_.1} parent=1 // pred_fallthru
      _
    // Predicated region
    $region30: #{_lambda_.1} parent=1 // pred_check
      _
    $region31: #{_lambda_.1} parent=1 // pred_check_branch
      %30 = sbr.rel (0) target = $region33
    $region32: #{_lambda_.1} parent=1 // pred_region
      _
    $region33: #{_lambda_.1} parent=1 // pred_fallthru
      _
    // Predicated region
    $region34: #{_lambda_.1} parent=1 // pred_check
      _
    $region35: #{_lambda_.1} parent=1 // pred_check_branch
      %32 = sbr.rel (0) target = $region37
    $region36: #{_lambda_.1} parent=1 // pred_region
      _
    $region37: #{_lambda_.1} parent=1 // pred_fallthru
      _
    %v33 = vld [vmem:[%s0] sm:$0xff]
    %v34 = vld [vmem:[%s2] sm:$0xff]
    %v35 = vld [vmem:[%s2 + $0x8] sm:$0xff]
    %v36 = vld [vmem:[%s1] sm:$0xff]
    %v37 = vld [vmem:[%s3] sm:$0xff]
    %v38 = vld [vmem:[%s3 + $0x8] sm:$0xff]
    %vm39 = vcmask 130048
    %v41 = vsel %vm39, %v36, 0
    %43 = vmatprep.subr.mxu0 0.0
    %44 = vmatpush1.msra.mxu0 0.0
    %45 = vmatprep.subr.mxu0 0.0
    %46 = vmatpush1.msra.mxu0 0.0
    %47 = vmatprep.subr.mxu0 0.0
    %48 = vmatpush1.msra.mxu0 0.0
    %49 = vmatprep.subr.mxu0 0.0
    %50 = vmatpush1.msra.mxu0 0.0
    %51 = vmatprep.subr.mxu0 0.0
    %52 = vmatpush1.msra.mxu0 0.0
    %53 = vmatprep.subr.mxu0 0.0
    %54 = vmatpush1.msra.mxu0 0.0
    %55 = vmatprep.subr.mxu0 0.0
    %56 = vmatpush1.msra.mxu0 0.0
    %57 = vmatprep.subr.mxu0 0.0
    %58 = vmatpush1.msra.mxu0 0.0
    %59 = vmatprep.subr.mxu0 0.0
    %60 = vmatpush1.msra.mxu0 0.0
    %61 = vmatprep.subr.mxu0 0.0
    %62 = vmatpush1.msra.mxu0 0.0
    %63 = vmatprep.subr.mxu0 0.0
    %64 = vmatpush1.msra.mxu0 0.0
    %65 = vmatprep.subr.mxu0 0.0
    %66 = vmatpush1.msra.mxu0 0.0
    %67 = vmatprep.subr.mxu0 0.0
    %68 = vmatpush1.msra.mxu0 0.0
    %69 = vmatprep.subr.mxu0 0.0
    %70 = vmatpush1.msra.mxu0 0.0
    %71 = vmatprep.subr.mxu0 0.0
    %72 = vmatpush1.msra.mxu0 %v38
    %73 = vmatprep.subr.mxu0 0.0
    %74 = vmatpush1.msra.mxu0 %v37
    %75 = vmatprep.subr.mxu0 0.0
    %76 = vmatpush2.msra.mxu0 0.0
    %77 = vmatprep.subr.mxu0 0.0
    %78 = vmatpush2.msra.mxu0 0.0
    %79 = vmatprep.subr.mxu0 0.0
    %80 = vmatpush2.msra.mxu0 0.0
    %81 = vmatprep.subr.mxu0 0.0
    %82 = vmatpush2.msra.mxu0 0.0
    %83 = vmatprep.subr.mxu0 0.0
    %84 = vmatpush2.msra.mxu0 0.0
    %85 = vmatprep.subr.mxu0 0.0
    %86 = vmatpush2.msra.mxu0 0.0
    %87 = vmatprep.subr.mxu0 0.0
    %88 = vmatpush2.msra.mxu0 0.0
    %89 = vmatprep.subr.mxu0 0.0
    %90 = vmatpush2.msra.mxu0 0.0
    %91 = vmatprep.subr.mxu0 0.0
    %92 = vmatpush2.msra.mxu0 0.0
    %93 = vmatprep.subr.mxu0 0.0
    %94 = vmatpush2.msra.mxu0 0.0
    %95 = vmatprep.subr.mxu0 0.0
    %96 = vmatpush2.msra.mxu0 0.0
    %97 = vmatprep.subr.mxu0 0.0
    %98 = vmatpush2.msra.mxu0 0.0
    %99 = vmatprep.subr.mxu0 0.0
    %100 = vmatpush2.msra.mxu0 0.0
    %101 = vmatprep.subr.mxu0 0.0
    %102 = vmatpush2.msra.mxu0 0.0
    %103 = vmatprep.subr.mxu0 0.0
    %104 = vmatpush2.msra.mxu0 0.0
    %105 = vmatprep.subr.mxu0 0.0
    %106 = vmatpush2.msra.mxu0 0.0
    %107 = vmatprep.mubr.f32.mxu0 0.0
    %108 = vmatmul.mubr.f32.gmra.mxu0 %v41
    %v109 = vpop.f32.mrf.mxu0
    %v110 = vadd.f32 0.0, %v109
    %v111 = vpop.f32.mrf.mxu0
    %112 = vdwg.mxu0
    %v114 = vsel %vm39, %v33, 0
    %116 = vmatprep.subr.mxu0 0.0
    %117 = vmatpush1.msra.mxu0 0.0
    %118 = vmatprep.subr.mxu0 0.0
    %119 = vmatpush1.msra.mxu0 0.0
    %120 = vmatprep.subr.mxu0 0.0
    %121 = vmatpush1.msra.mxu0 0.0
    %122 = vmatprep.subr.mxu0 0.0
    %123 = vmatpush1.msra.mxu0 0.0
    %124 = vmatprep.subr.mxu0 0.0
    %125 = vmatpush1.msra.mxu0 0.0
    %126 = vmatprep.subr.mxu0 0.0
    %127 = vmatpush1.msra.mxu0 0.0
    %128 = vmatprep.subr.mxu0 0.0
    %129 = vmatpush1.msra.mxu0 0.0
    %130 = vmatprep.subr.mxu0 0.0
    %131 = vmatpush1.msra.mxu0 0.0
    %132 = vmatprep.subr.mxu0 0.0
    %133 = vmatpush1.msra.mxu0 0.0
    %134 = vmatprep.subr.mxu0 0.0
    %135 = vmatpush1.msra.mxu0 0.0
    %136 = vmatprep.subr.mxu0 0.0
    %137 = vmatpush1.msra.mxu0 0.0
    %138 = vmatprep.subr.mxu0 0.0
    %139 = vmatpush1.msra.mxu0 0.0
    %140 = vmatprep.subr.mxu0 0.0
    %141 = vmatpush1.msra.mxu0 0.0
    %142 = vmatprep.subr.mxu0 0.0
    %143 = vmatpush1.msra.mxu0 0.0
    %144 = vmatprep.subr.mxu0 0.0
    %145 = vmatpush1.msra.mxu0 %v35
    %146 = vmatprep.subr.mxu0 0.0
    %147 = vmatpush1.msra.mxu0 %v34
    %148 = vmatprep.subr.mxu0 0.0
    %149 = vmatpush2.msra.mxu0 0.0
    %150 = vmatprep.subr.mxu0 0.0
    %151 = vmatpush2.msra.mxu0 0.0
    %152 = vmatprep.subr.mxu0 0.0
    %153 = vmatpush2.msra.mxu0 0.0
    %154 = vmatprep.subr.mxu0 0.0
    %155 = vmatpush2.msra.mxu0 0.0
    %156 = vmatprep.subr.mxu0 0.0
    %157 = vmatpush2.msra.mxu0 0.0
    %158 = vmatprep.subr.mxu0 0.0
    %159 = vmatpush2.msra.mxu0 0.0
    %160 = vmatprep.subr.mxu0 0.0
    %161 = vmatpush2.msra.mxu0 0.0
    %162 = vmatprep.subr.mxu0 0.0
    %163 = vmatpush2.msra.mxu0 0.0
    %164 = vmatprep.subr.mxu0 0.0
    %165 = vmatpush2.msra.mxu0 0.0
    %166 = vmatprep.subr.mxu0 0.0
    %167 = vmatpush2.msra.mxu0 0.0
    %168 = vmatprep.subr.mxu0 0.0
    %169 = vmatpush2.msra.mxu0 0.0
    %170 = vmatprep.subr.mxu0 0.0
    %171 = vmatpush2.msra.mxu0 0.0
    %172 = vmatprep.subr.mxu0 0.0
    %173 = vmatpush2.msra.mxu0 0.0
    %174 = vmatprep.subr.mxu0 0.0
    %175 = vmatpush2.msra.mxu0 0.0
    %176 = vmatprep.subr.mxu0 0.0
    %177 = vmatpush2.msra.mxu0 0.0
    %178 = vmatprep.subr.mxu0 0.0
    %179 = vmatpush2.msra.mxu0 0.0
    %180 = vmatprep.mubr.f32.mxu0 0.0
    %181 = vmatmul.mubr.f32.gmra.mxu0 %v114
    %v182 = vpop.f32.mrf.mxu0
    %v183 = vadd.f32 %v110, %v182
    %v184 = vpop.f32.mrf.mxu0
    %185 = vdwg.mxu0
    %v186 = vld [vmem:[%s4] sm:$0x1]
    %v188 = vlaneseq
    %v189 = vshrl.u32 %v188, 7
    %v190 = vsub.s32 0, %v189
    %v191 = vrot.slane %v186, %v190
    %v193 = vadd.f32 %v183, %v191
    %vm194 = vcmp.ge.f32.partialorder %v193, 0.0
    %v195 = vmul.f32 %v193, 0.01
    %v196 = vsel %vm194, %v193, %v195
    %v197 = vld [vmem:[%s5] sm:$0xff]
    %v198 = vld [vmem:[%s5 + $0x8] sm:$0xff]
    %v199 = vld [vmem:[%s5 + $0x10] sm:$0xff]
    %v200 = vld [vmem:[%s5 + $0x18] sm:$0xff]
    %v201 = vld [vmem:[%s5 + $0x20] sm:$0xff]
    %v202 = vld [vmem:[%s5 + $0x28] sm:$0xff]
    %v203 = vld [vmem:[%s5 + $0x30] sm:$0xff]
    %v204 = vld [vmem:[%s5 + $0x38] sm:$0xff]
    %v205 = vld [vmem:[%s6] sm:$0x1]
    %v207 = vlaneseq
    %v208 = vshrl.u32 %v207, 7
    %v209 = vsub.s32 0, %v208
    %v210 = vrot.slane %v205, %v209
    %vm212 = vcmask 523264
    %v214 = vsel %vm212, %v196, 0
    %216 = vmatprep.subr.mxu0 0.0
    %217 = vmatpush1.msra.mxu0 0.0
    %218 = vmatprep.subr.mxu0 0.0
    %219 = vmatpush1.msra.mxu0 0.0
    %220 = vmatprep.subr.mxu0 0.0
    %221 = vmatpush1.msra.mxu0 0.0
    %222 = vmatprep.subr.mxu0 0.0
    %223 = vmatpush1.msra.mxu0 0.0
    %224 = vmatprep.subr.mxu0 0.0
    %225 = vmatpush1.msra.mxu0 0.0
    %226 = vmatprep.subr.mxu0 0.0
    %227 = vmatpush1.msra.mxu0 0.0
    %228 = vmatprep.subr.mxu0 0.0
    %229 = vmatpush1.msra.mxu0 0.0
    %230 = vmatprep.subr.mxu0 0.0
    %231 = vmatpush1.msra.mxu0 0.0
    %232 = vmatprep.subr.mxu0 0.0
    %233 = vmatpush1.msra.mxu0 %v204
    %234 = vmatprep.subr.mxu0 0.0
    %235 = vmatpush1.msra.mxu0 %v203
    %236 = vmatprep.subr.mxu0 0.0
    %237 = vmatpush1.msra.mxu0 %v202
    %238 = vmatprep.subr.mxu0 0.0
    %239 = vmatpush1.msra.mxu0 %v201
    %240 = vmatprep.subr.mxu0 0.0
    %241 = vmatpush1.msra.mxu0 %v200
    %242 = vmatprep.subr.mxu0 0.0
    %243 = vmatpush1.msra.mxu0 %v199
    %244 = vmatprep.subr.mxu0 0.0
    %245 = vmatpush1.msra.mxu0 %v198
    %246 = vmatprep.subr.mxu0 0.0
    %247 = vmatpush1.msra.mxu0 %v197
    %248 = vmatprep.subr.mxu0 0.0
    %249 = vmatpush2.msra.mxu0 0.0
    %250 = vmatprep.subr.mxu0 0.0
    %251 = vmatpush2.msra.mxu0 0.0
    %252 = vmatprep.subr.mxu0 0.0
    %253 = vmatpush2.msra.mxu0 0.0
    %254 = vmatprep.subr.mxu0 0.0
    %255 = vmatpush2.msra.mxu0 0.0
    %256 = vmatprep.subr.mxu0 0.0
    %257 = vmatpush2.msra.mxu0 0.0
    %258 = vmatprep.subr.mxu0 0.0
    %259 = vmatpush2.msra.mxu0 0.0
    %260 = vmatprep.subr.mxu0 0.0
    %261 = vmatpush2.msra.mxu0 0.0
    %262 = vmatprep.subr.mxu0 0.0
    %263 = vmatpush2.msra.mxu0 0.0
    %264 = vmatprep.subr.mxu0 0.0
    %265 = vmatpush2.msra.mxu0 0.0
    %266 = vmatprep.subr.mxu0 0.0
    %267 = vmatpush2.msra.mxu0 0.0
    %268 = vmatprep.subr.mxu0 0.0
    %269 = vmatpush2.msra.mxu0 0.0
    %270 = vmatprep.subr.mxu0 0.0
    %271 = vmatpush2.msra.mxu0 0.0
    %272 = vmatprep.subr.mxu0 0.0
    %273 = vmatpush2.msra.mxu0 0.0
    %274 = vmatprep.subr.mxu0 0.0
    %275 = vmatpush2.msra.mxu0 0.0
    %276 = vmatprep.subr.mxu0 0.0
    %277 = vmatpush2.msra.mxu0 0.0
    %278 = vmatprep.subr.mxu0 0.0
    %279 = vmatpush2.msra.mxu0 0.0
    %280 = vmatprep.mubr.f32.mxu0 0.0
    %281 = vmatmul.mubr.f32.gmra.mxu0 %v214
    %v282 = vpop.f32.mrf.mxu0
    %v283 = vadd.f32 %v210, %v282
    %v284 = vpop.f32.mrf.mxu0
    %285 = vdwg.mxu0
    %vm286 = vcmp.ge.f32.partialorder %v283, 0.0
    %v287 = vmul.f32 %v283, 0.01
    %v288 = vsel %vm286, %v283, %v287
    %v289 = vld [vmem:[%s7] sm:$0xff]
    %v290 = vld [vmem:[%s7 + $0x8] sm:$0xff]
    %v291 = vld [vmem:[%s7 + $0x10] sm:$0xff]
    %v292 = vld [vmem:[%s7 + $0x18] sm:$0xff]
    %v293 = vld [vmem:[%s8] sm:$0x1]
    %v295 = vlaneseq
    %v296 = vshrl.u32 %v295, 7
    %v297 = vsub.s32 0, %v296
    %v298 = vrot.slane %v293, %v297
    %vm300 = vcmask 261120
    %v302 = vsel %vm300, %v288, 0
    %304 = vmatprep.subr.mxu0 0.0
    %305 = vmatpush1.msra.mxu0 0.0
    %306 = vmatprep.subr.mxu0 0.0
    %307 = vmatpush1.msra.mxu0 0.0
    %308 = vmatprep.subr.mxu0 0.0
    %309 = vmatpush1.msra.mxu0 0.0
    %310 = vmatprep.subr.mxu0 0.0
    %311 = vmatpush1.msra.mxu0 0.0
    %312 = vmatprep.subr.mxu0 0.0
    %313 = vmatpush1.msra.mxu0 0.0
    %314 = vmatprep.subr.mxu0 0.0
    %315 = vmatpush1.msra.mxu0 0.0
    %316 = vmatprep.subr.mxu0 0.0
    %317 = vmatpush1.msra.mxu0 0.0
    %318 = vmatprep.subr.mxu0 0.0
    %319 = vmatpush1.msra.mxu0 0.0
    %320 = vmatprep.subr.mxu0 0.0
    %321 = vmatpush1.msra.mxu0 0.0
    %322 = vmatprep.subr.mxu0 0.0
    %323 = vmatpush1.msra.mxu0 0.0
    %324 = vmatprep.subr.mxu0 0.0
    %325 = vmatpush1.msra.mxu0 0.0
    %326 = vmatprep.subr.mxu0 0.0
    %327 = vmatpush1.msra.mxu0 0.0
    %328 = vmatprep.subr.mxu0 0.0
    %329 = vmatpush1.msra.mxu0 %v292
    %330 = vmatprep.subr.mxu0 0.0
    %331 = vmatpush1.msra.mxu0 %v291
    %332 = vmatprep.subr.mxu0 0.0
    %333 = vmatpush1.msra.mxu0 %v290
    %334 = vmatprep.subr.mxu0 0.0
    %335 = vmatpush1.msra.mxu0 %v289
    %336 = vmatprep.subr.mxu0 0.0
    %337 = vmatpush2.msra.mxu0 0.0
    %338 = vmatprep.subr.mxu0 0.0
    %339 = vmatpush2.msra.mxu0 0.0
    %340 = vmatprep.subr.mxu0 0.0
    %341 = vmatpush2.msra.mxu0 0.0
    %342 = vmatprep.subr.mxu0 0.0
    %343 = vmatpush2.msra.mxu0 0.0
    %344 = vmatprep.subr.mxu0 0.0
    %345 = vmatpush2.msra.mxu0 0.0
    %346 = vmatprep.subr.mxu0 0.0
    %347 = vmatpush2.msra.mxu0 0.0
    %348 = vmatprep.subr.mxu0 0.0
    %349 = vmatpush2.msra.mxu0 0.0
    %350 = vmatprep.subr.mxu0 0.0
    %351 = vmatpush2.msra.mxu0 0.0
    %352 = vmatprep.subr.mxu0 0.0
    %353 = vmatpush2.msra.mxu0 0.0
    %354 = vmatprep.subr.mxu0 0.0
    %355 = vmatpush2.msra.mxu0 0.0
    %356 = vmatprep.subr.mxu0 0.0
    %357 = vmatpush2.msra.mxu0 0.0
    %358 = vmatprep.subr.mxu0 0.0
    %359 = vmatpush2.msra.mxu0 0.0
    %360 = vmatprep.subr.mxu0 0.0
    %361 = vmatpush2.msra.mxu0 0.0
    %362 = vmatprep.subr.mxu0 0.0
    %363 = vmatpush2.msra.mxu0 0.0
    %364 = vmatprep.subr.mxu0 0.0
    %365 = vmatpush2.msra.mxu0 0.0
    %366 = vmatprep.subr.mxu0 0.0
    %367 = vmatpush2.msra.mxu0 0.0
    %368 = vmatprep.mubr.f32.mxu0 0.0
    %369 = vmatmul.mubr.f32.gmra.mxu0 %v302
    %v370 = vpop.f32.mrf.mxu0
    %v371 = vadd.f32 %v298, %v370
    %v372 = vpop.f32.mrf.mxu0
    %373 = vdwg.mxu0
    %vm374 = vcmask 64512
    %375 = vst.msk [vmem:[#allocation2] sm:$0xff] %vm374, %v371
    // Predicated region
    $region38: #{_lambda_.1} parent=1 // pred_check
      _
    $region39: #{_lambda_.1} parent=1 // pred_check_branch
      %377 = sbr.rel (0) target = $region41
    $region40: #{_lambda_.1} parent=1 // pred_region
      %s379 = ssub.s32 128, 128
      %380 = vsyncadd [#allocation3], %s379
      %s382 = sshll.u32 [#allocation2], 4
      %s383 = int_to_ptr.vmem [resolvable:$true] %s382
      %385 = dma.vmem_to_hbm [thread:$0]  %s383, 128, %s9, [#allocation3]
    $region41: #{_lambda_.1} parent=1 // pred_fallthru
      _
    // Predicated region
    $region42: #{_lambda_.1} parent=1 // pred_check
      _
    $region43: #{_lambda_.1} parent=1 // pred_check_branch
      %387 = sbr.rel (0) target = $region45
    $region44: #{_lambda_.1} parent=1 // pred_region
      %388 = dma.done [#allocation3], 128
    $region45: #{_lambda_.1} parent=1 // pred_fallthru
      _
    %389 = vsyncpa [#allocation3], 1

</llo_original>
